<compile_context>
chip_gen: v5e
topology: v5e:2x2
jax: 0.10.0
libtpu: 0.0.40
codegen_flags: <defaults>
</compile_context>

<pallas_src>
import math
import functools

import jax
import jax.numpy as jnp
from jax import lax
from jax.experimental import pallas as pl
from jax.experimental.pallas import tpu as pltpu


def icl_attention_kernel(q_ref, k_ref, v_ref, wqkv_ref, wo_ref, o_ref, *,
                         n_heads, head_dim, compute_dtype):
    """One grid step == one block of BLK_B batch elements."""
    BLK_B, S, E = q_ref.shape
    N = BLK_B * S
    H, D = n_heads, head_dim
    cd = compute_dtype

    # ---- Q/K/V projections: three (N, E) @ (E, E) matmuls, f32 accumulation --
    # (attn_scale is already folded into the Wq slot of wqkv in the wrapper;
    #  activations arrive f32 from HBM and are cast here, hidden under the MXU)
    xq = q_ref[...].reshape(N, E).astype(cd)
    xk = k_ref[...].reshape(N, E).astype(cd)
    xv = v_ref[...].reshape(N, E).astype(cd)

    qp = jnp.dot(xq, wqkv_ref[0], preferred_element_type=jnp.float32)
    kp = jnp.dot(xk, wqkv_ref[1], preferred_element_type=jnp.float32)
    vp = jnp.dot(xv, wqkv_ref[2], preferred_element_type=jnp.float32)

    # cast ONCE to the compute dtype; leading-dim reshapes only (cheap)
    qp = qp.astype(cd).reshape(BLK_B, S, E)
    kp = kp.astype(cd).reshape(BLK_B, S, E)
    vp = vp.astype(cd).reshape(BLK_B, S, E)

    # ---- heads -> batch axis: (BLK_B, S, H*D) -> (H*BLK_B, S, D) -------------
    # (lane-dim slices + one leading-axis concat: robust Mosaic lowering)
    def to_head_batch(x):
        return jnp.concatenate(
            [x[:, :, h * D:(h + 1) * D] for h in range(H)], axis=0)

    qh = to_head_batch(qp)          # (H*BLK_B, S, D)
    kh = to_head_batch(kp)
    vh = to_head_batch(vp)

    # ---- mask as a single additive f32 bias (computed & applied once) --------
    # PyTorch: triu(ones(S,S), diagonal=0) with mask[0,0] = False  (True == masked)
    row = lax.broadcasted_iota(jnp.int32, (S, S), 0)   # query index i
    col = lax.broadcasted_iota(jnp.int32, (S, S), 1)   # key index j
    masked = (col >= row) & jnp.logical_not((row == 0) & (col == 0))
    bias = jnp.where(masked, jnp.float32(-1e30), jnp.float32(0.0))   # (S, S)

    # ---- ONE batched score matmul, ONE softmax, ONE context matmul -----------
    scores = jnp.einsum('bqd,bkd->bqk', qh, kh,
                        preferred_element_type=jnp.float32)   # (H*BLK_B, S, S)
    scores = scores + bias[None, :, :]

    m = jnp.max(scores, axis=-1, keepdims=True)
    p = jnp.exp(scores - m)
    # every row has >= 1 unmasked key (the (0,0) carve-out), so the denominator
    # is >= 1 and the approximate EUP reciprocal is safe.
    inv = pl.reciprocal(jnp.sum(p, axis=-1, keepdims=True), approx=True)
    probs = (p * inv).astype(cd)
    # drop_attn (p=0.1): identity in eval mode

    ctx = jnp.einsum('bqk,bkd->bqd', probs, vh,
                     preferred_element_type=jnp.float32)      # (H*BLK_B, S, D)

    # ---- concat heads back on the lane dim, ONE output-projection matmul -----
    ctx_cat = jnp.concatenate(
        [ctx[h * BLK_B:(h + 1) * BLK_B] for h in range(H)], axis=-1)  # (BLK_B,S,E)
    out = jnp.dot(ctx_cat.reshape(N, E).astype(cd), wo_ref[...],
                  preferred_element_type=jnp.float32)          # (N, E) f32
    # drop_resid (p=0.1): identity in eval mode

    if o_ref.ndim == 2:
        # lane-dense (BLK_B, S*E) output slab -> unmasked full-lane stores
        out3 = out.reshape(BLK_B, S, E)
        slab = jnp.concatenate([out3[:, s, :] for s in range(S)], axis=-1)
        o_ref[...] = slab.astype(o_ref.dtype)
    else:
        o_ref[...] = out.reshape(BLK_B, S, E).astype(o_ref.dtype)


def _num_tensorcores():
    """Best-effort TensorCores-per-device detection (v5e/v6e -> 1, v7x/v4/v5p -> 2)."""
    try:
        info = pltpu.get_tpu_info()
        for name in ("num_cores", "cores_per_chip", "core_count",
                     "num_tensorcores", "tensorcores_per_chip"):
            n = getattr(info, name, None)
            if isinstance(n, int) and 0 < n <= 8:
                return n
    except Exception:
        pass
    try:
        kind = jax.devices()[0].device_kind.lower()
        if any(t in kind for t in ("v7", "7x", "v5p", "v4")):
            return 2
    except Exception:
        pass
    return 1


def _choose_block_b(B, S, num_tc=1, target_rows=512):
    """Largest divisor of B with block_b*S <= ~target_rows; on multi-TC chips,
    keep the number of grid steps a multiple of num_tc so no core idles."""
    divisors = [d for d in range(1, B + 1) if B % d == 0]
    cap = max(1, target_rows // max(S, 1))
    fitting = [d for d in divisors if d <= cap]
    blk = max(fitting) if fitting else 1
    if num_tc > 1 and B >= num_tc:
        ok = [d for d in divisors if d <= blk and (B // d) % num_tc == 0]
        if ok:
            blk = max(ok)
    return blk


def icl_attention(q, k, v, wq, wk, wv, wo, n_heads, *,
                  compute_dtype=jnp.bfloat16, block_b=None, num_tensorcores=None):
    B, S, E = q.shape
    assert E % n_heads == 0
    head_dim = E // n_heads
    attn_scale = 1.0 / math.sqrt(E)          # module: 1/sqrt(hidden_dim)
    out_dtype = q.dtype
    cd = jnp.dtype(compute_dtype) if compute_dtype is not None else q.dtype

    if num_tensorcores is None:
        num_tensorcores = _num_tensorcores()
    if block_b is None:
        block_b = _choose_block_b(B, S, num_tc=num_tensorcores)
    assert B % block_b == 0
    grid = (B // block_b,)

    # nn.Linear weights are (out, in): pre-transpose to (in, out), fold the
    # attention scale into W_q, stack into ONE (3, E, E) operand, pre-cast to
    # the MXU compute dtype.  Activations are NOT pre-cast (stay f32 in HBM;
    # the in-kernel cast hides under the MXU, no extra HBM pass).
    w_qkv = jnp.stack([(wq * attn_scale).T, wk.T, wv.T], axis=0).astype(cd)
    wo_t = wo.T.astype(cd)

    lane_dense = (E % 128 != 0) and ((S * E) % 128 == 0) and \
                 (block_b == B or block_b % 8 == 0)
    if lane_dense:
        out_shape = jax.ShapeDtypeStruct((B, S * E), out_dtype)
        out_spec = pl.BlockSpec((block_b, S * E), lambda b: (b, 0))
    else:
        out_shape = jax.ShapeDtypeStruct((B, S, E), out_dtype)
        out_spec = pl.BlockSpec((block_b, S, E), lambda b: (b, 0, 0))

    data_spec = pl.BlockSpec((block_b, S, E), lambda b: (b, 0, 0))
    wqkv_spec = pl.BlockSpec((3, E, E), lambda b: (0, 0, 0))
    wo_spec = pl.BlockSpec((E, E), lambda b: (0, 0))

    cd_bytes = jnp.dtype(cd).itemsize
    est = (2 * 3 * block_b * S * E * 4            # double-buffered f32 activations
           + 2 * (3 * E * E + E * E) * cd_bytes    # double-buffered weights
           + 2 * block_b * S * E * 4               # double-buffered output
           + 8 * block_b * S * E * 4)              # in-kernel temporaries (generous)
    vmem_limit = int(min(64 << 20, max(32 << 20, 4 * est)))

    kernel = functools.partial(icl_attention_kernel, n_heads=n_heads,
                               head_dim=head_dim, compute_dtype=cd)

    out = pl.pallas_call(
        kernel,
        out_shape=out_shape,
        grid=grid,
        in_specs=[data_spec, data_spec, data_spec, wqkv_spec, wo_spec],
        out_specs=out_spec,
        compiler_params=pltpu.CompilerParams(
            dimension_semantics=("parallel",),
            vmem_limit_bytes=vmem_limit),
    )(q, k, v, w_qkv, wo_t)

    if lane_dense:
        out = out.reshape(B, S, E)     # row-major reshape: free in XLA
    return out


def icl_attention_reference(q, k, v, wq, wk, wv, wo, n_heads):
    """Plain-JAX transcription of the PyTorch forward (eval mode) for checking."""
    B, S, E = q.shape
    D = E // n_heads
    scale = 1.0 / math.sqrt(E)
    qp = (q @ wq.T).reshape(B, S, n_heads, D).transpose(0, 2, 1, 3)
    kp = (k @ wk.T).reshape(B, S, n_heads, D).transpose(0, 2, 1, 3)
    vp = (v @ wv.T).reshape(B, S, n_heads, D).transpose(0, 2, 1, 3)
    mask = jnp.triu(jnp.ones((S, S), dtype=bool), k=0)
    mask = mask.at[0, 0].set(False)
    scores = jnp.einsum('bhqd,bhkd->bhqk', qp, kp) * scale
    scores = jnp.where(mask, -jnp.inf, scores)
    probs = jax.nn.softmax(scores, axis=-1)
    ctx = jnp.einsum('bhqk,bhkd->bhqd', probs, vp)
    ctx = ctx.transpose(0, 2, 1, 3).reshape(B, S, E)
    return ctx @ wo.T


if __name__ == "__main__":
    # config: hidden_dim=32, n_heads=2, icl_use_wv=True, icl_use_rotary_embedding=False
    B, S, E, H = 2, 8, 32, 2

    key = jax.random.PRNGKey(0)
    kq, kk, kv, kwq, kwk, kwv, kwo = jax.random.split(key, 7)

    q = jax.random.normal(kq, (B, S, E), dtype=jnp.float32)
    k = jax.random.normal(kk, (B, S, E), dtype=jnp.float32)
    v = jax.random.normal(kv, (B, S, E), dtype=jnp.float32)

    # nn.Linear weights, (out_features, in_features), deterministic init
    wq = 0.05 * jax.random.normal(kwq, (E, E), dtype=jnp.float32)
    wk = 0.05 * jax.random.normal(kwk, (E, E), dtype=jnp.float32)
    wv = 0.05 * jax.random.normal(kwv, (E, E), dtype=jnp.float32)
    wo = 0.05 * jax.random.normal(kwo, (E, E), dtype=jnp.float32)

    ref = icl_attention_reference(q, k, v, wq, wk, wv, wo, H)

    # exact-semantics path (f32 MXU operands)
    out_f32 = icl_attention(q, k, v, wq, wk, wv, wo, H,
                            compute_dtype=jnp.float32)
    out_f32 = jax.block_until_ready(out_f32)
    assert out_f32.shape == (B, S, E) and out_f32.dtype == jnp.float32
    assert jnp.allclose(out_f32, ref, atol=2e-3, rtol=2e-3), (
        f"f32 path: max abs err = {jnp.max(jnp.abs(out_f32 - ref))}")

    # production path (bf16 MXU operands, f32 accumulation & f32 softmax)
    out_bf16 = icl_attention(q, k, v, wq, wk, wv, wo, H,
                             compute_dtype=jnp.bfloat16)
    out_bf16 = jax.block_until_ready(out_bf16)
    assert out_bf16.shape == (B, S, E) and out_bf16.dtype == jnp.float32
    assert jnp.allclose(out_bf16, ref, atol=3e-2, rtol=3e-2), (
        f"bf16 path: max abs err = {jnp.max(jnp.abs(out_bf16 - ref))}")

    print("KERNEL_OK")
</pallas_src>

<mosaic_0001>
module attributes {stable_mosaic.version = 11 : i64} {
  func.func @icl_attention_kernel(%arg0: i32, %arg1: memref<2x8x32xf32, #tpu.memory_space<vmem>>, %arg2: memref<2x8x32xf32, #tpu.memory_space<vmem>>, %arg3: memref<2x8x32xf32, #tpu.memory_space<vmem>>, %arg4: memref<3x32x32xf32, #tpu.memory_space<vmem>>, %arg5: memref<32x32xf32, #tpu.memory_space<vmem>>, %arg6: memref<2x256xf32, #tpu.memory_space<vmem>>) attributes {dimension_semantics = [#tpu.dimension_semantics<parallel>], iteration_bounds = array<i64: 1>, scalar_prefetch = 0 : i64, scratch_operands = 0 : i64, tpu.core_type = #tpu.core_type<tc>, window_params = [{transform_indices = @transform_0, window_bounds = array<i64: 2, 8, 32>}, {transform_indices = @transform_1, window_bounds = array<i64: 2, 8, 32>}, {transform_indices = @transform_2, window_bounds = array<i64: 2, 8, 32>}, {pipeline_mode = #tpu.pipeline_mode<synchronous>, transform_indices = @transform_3, window_bounds = array<i64: 3, 32, 32>}, {pipeline_mode = #tpu.pipeline_mode<synchronous>, transform_indices = @transform_4, window_bounds = array<i64: 32, 32>}, {transform_indices = @transform_5, window_bounds = array<i64: 2, 256>}]} {
    %c0 = arith.constant 0 : index
    %c0_0 = arith.constant 0 : index
    %c0_1 = arith.constant 0 : index
    %0 = vector.load %arg1[%c0, %c0_0, %c0_1] : memref<2x8x32xf32, #tpu.memory_space<vmem>>, vector<2x8x32xf32>
    %1 = vector.shape_cast %0 : vector<2x8x32xf32> to vector<16x32xf32>
    %c0_2 = arith.constant 0 : index
    %c0_3 = arith.constant 0 : index
    %c0_4 = arith.constant 0 : index
    %2 = vector.load %arg2[%c0_2, %c0_3, %c0_4] : memref<2x8x32xf32, #tpu.memory_space<vmem>>, vector<2x8x32xf32>
    %3 = vector.shape_cast %2 : vector<2x8x32xf32> to vector<16x32xf32>
    %c0_5 = arith.constant 0 : index
    %c0_6 = arith.constant 0 : index
    %c0_7 = arith.constant 0 : index
    %4 = vector.load %arg3[%c0_5, %c0_6, %c0_7] : memref<2x8x32xf32, #tpu.memory_space<vmem>>, vector<2x8x32xf32>
    %5 = vector.shape_cast %4 : vector<2x8x32xf32> to vector<16x32xf32>
    %c0_8 = arith.constant 0 : index
    %c0_9 = arith.constant 0 : index
    %c0_10 = arith.constant 0 : index
    %6 = vector.load %arg4[%c0_8, %c0_9, %c0_10] : memref<3x32x32xf32, #tpu.memory_space<vmem>>, vector<1x32x32xf32>
    %7 = vector.shape_cast %6 : vector<1x32x32xf32> to vector<32x32xf32>
    %cst = arith.constant dense<0.000000e+00> : vector<16x32xf32>
    %8 = tpu.matmul %1, %7, %cst {dimension_numbers = #tpu.dot_dimension_numbers<[1], [0], [0], [1], [0, 0, 1, 1], [], []>} : vector<16x32xf32>, vector<32x32xf32>, vector<16x32xf32> -> vector<16x32xf32>
    %c1 = arith.constant 1 : index
    %c0_11 = arith.constant 0 : index
    %c0_12 = arith.constant 0 : index
    %9 = vector.load %arg4[%c1, %c0_11, %c0_12] : memref<3x32x32xf32, #tpu.memory_space<vmem>>, vector<1x32x32xf32>
    %10 = vector.shape_cast %9 : vector<1x32x32xf32> to vector<32x32xf32>
    %cst_13 = arith.constant dense<0.000000e+00> : vector<16x32xf32>
    %11 = tpu.matmul %3, %10, %cst_13 {dimension_numbers = #tpu.dot_dimension_numbers<[1], [0], [0], [1], [0, 0, 1, 1], [], []>} : vector<16x32xf32>, vector<32x32xf32>, vector<16x32xf32> -> vector<16x32xf32>
    %c2 = arith.constant 2 : index
    %c0_14 = arith.constant 0 : index
    %c0_15 = arith.constant 0 : index
    %12 = vector.load %arg4[%c2, %c0_14, %c0_15] : memref<3x32x32xf32, #tpu.memory_space<vmem>>, vector<1x32x32xf32>
    %13 = vector.shape_cast %12 : vector<1x32x32xf32> to vector<32x32xf32>
    %cst_16 = arith.constant dense<0.000000e+00> : vector<16x32xf32>
    %14 = tpu.matmul %5, %13, %cst_16 {dimension_numbers = #tpu.dot_dimension_numbers<[1], [0], [0], [1], [0, 0, 1, 1], [], []>} : vector<16x32xf32>, vector<32x32xf32>, vector<16x32xf32> -> vector<16x32xf32>
    %15 = vector.shape_cast %8 : vector<16x32xf32> to vector<2x8x32xf32>
    %16 = vector.shape_cast %11 : vector<16x32xf32> to vector<2x8x32xf32>
    %17 = vector.shape_cast %14 : vector<16x32xf32> to vector<2x8x32xf32>
    %18 = vector.extract_strided_slice %15 {offsets = [0, 0, 0], sizes = [2, 8, 16], strides = [1, 1, 1]} : vector<2x8x32xf32> to vector<2x8x16xf32>
    %19 = vector.extract_strided_slice %15 {offsets = [0, 0, 16], sizes = [2, 8, 16], strides = [1, 1, 1]} : vector<2x8x32xf32> to vector<2x8x16xf32>
    %20 = tpu.concatenate %18, %19 in 0 : vector<2x8x16xf32>, vector<2x8x16xf32> -> vector<4x8x16xf32>
    %21 = vector.extract_strided_slice %16 {offsets = [0, 0, 0], sizes = [2, 8, 16], strides = [1, 1, 1]} : vector<2x8x32xf32> to vector<2x8x16xf32>
    %22 = vector.extract_strided_slice %16 {offsets = [0, 0, 16], sizes = [2, 8, 16], strides = [1, 1, 1]} : vector<2x8x32xf32> to vector<2x8x16xf32>
    %23 = tpu.concatenate %21, %22 in 0 : vector<2x8x16xf32>, vector<2x8x16xf32> -> vector<4x8x16xf32>
    %24 = vector.extract_strided_slice %17 {offsets = [0, 0, 0], sizes = [2, 8, 16], strides = [1, 1, 1]} : vector<2x8x32xf32> to vector<2x8x16xf32>
    %25 = vector.extract_strided_slice %17 {offsets = [0, 0, 16], sizes = [2, 8, 16], strides = [1, 1, 1]} : vector<2x8x32xf32> to vector<2x8x16xf32>
    %26 = tpu.concatenate %24, %25 in 0 : vector<2x8x16xf32>, vector<2x8x16xf32> -> vector<4x8x16xf32>
    %27 = tpu.iota {dimensions = array<i32: 0>} : vector<8x8xi32>
    %28 = tpu.iota {dimensions = array<i32: 1>} : vector<8x8xi32>
    %29 = arith.cmpi sge, %28, %27 : vector<8x8xi32>
    %c0_i32 = arith.constant 0 : i32
    %30 = vector.broadcast %c0_i32 : i32 to vector<8x8xi32>
    %31 = arith.cmpi eq, %27, %30 : vector<8x8xi32>
    %c0_i32_17 = arith.constant 0 : i32
    %32 = vector.broadcast %c0_i32_17 : i32 to vector<8x8xi32>
    %33 = arith.cmpi eq, %28, %32 : vector<8x8xi32>
    %34 = arith.andi %31, %33 : vector<8x8xi1>
    %cst_18 = arith.constant dense<true> : vector<8x8xi1>
    %35 = arith.xori %34, %cst_18 : vector<8x8xi1>
    %36 = arith.andi %29, %35 : vector<8x8xi1>
    %cst_19 = arith.constant -1.000000e+30 : f32
    %cst_20 = arith.constant 0.000000e+00 : f32
    %37 = vector.broadcast %cst_19 : f32 to vector<8x8xf32>
    %38 = vector.broadcast %cst_20 : f32 to vector<8x8xf32>
    %39 = arith.select %36, %37, %38 : vector<8x8xi1>, vector<8x8xf32>
    "tpu.trace_start"() <{level = 10 : i32, message = "bqd,bkd->bqk"}> : () -> ()
    %cst_21 = arith.constant dense<0.000000e+00> : vector<4x8x8xf32>
    %40 = tpu.matmul %20, %23, %cst_21 {dimension_numbers = #tpu.dot_dimension_numbers<[2], [2], [1], [1], [0, 0, 0, 1, 1, 1], [0], [0]>} : vector<4x8x16xf32>, vector<4x8x16xf32>, vector<4x8x8xf32> -> vector<4x8x8xf32>
    "tpu.trace_stop"() : () -> ()
    %41 = vector.shape_cast %39 : vector<8x8xf32> to vector<1x8x8xf32>
    %42 = vector.broadcast %41 : vector<1x8x8xf32> to vector<4x8x8xf32>
    %43 = arith.addf %40, %42 : vector<4x8x8xf32>
    %cst_22 = arith.constant dense<0xFF800000> : vector<4x8xf32>
    %44 = vector.multi_reduction <maximumf>, %43, %cst_22 [2] : vector<4x8x8xf32> to vector<4x8xf32>
    %45 = vector.shape_cast %44 : vector<4x8xf32> to vector<4x8x1xf32>
    %46 = vector.broadcast %45 : vector<4x8x1xf32> to vector<4x8x8xf32>
    %47 = arith.subf %43, %46 : vector<4x8x8xf32>
    %48 = math.exp %47 : vector<4x8x8xf32>
    %cst_23 = arith.constant dense<0.000000e+00> : vector<4x8xf32>
    %49 = vector.multi_reduction <add>, %48, %cst_23 [2] : vector<4x8x8xf32> to vector<4x8xf32>
    %50 = vector.shape_cast %49 : vector<4x8xf32> to vector<4x8x1xf32>
    %51 = tpu.reciprocal %50 {approx = true} : vector<4x8x1xf32> -> vector<4x8x1xf32>
    %52 = vector.broadcast %51 : vector<4x8x1xf32> to vector<4x8x8xf32>
    %53 = arith.mulf %48, %52 : vector<4x8x8xf32>
    "tpu.trace_start"() <{level = 10 : i32, message = "bqk,bkd->bqd"}> : () -> ()
    %cst_24 = arith.constant dense<0.000000e+00> : vector<4x8x16xf32>
    %54 = tpu.matmul %53, %26, %cst_24 {dimension_numbers = #tpu.dot_dimension_numbers<[2], [1], [1], [2], [0, 0, 0, 1, 1, 2], [0], [0]>} : vector<4x8x8xf32>, vector<4x8x16xf32>, vector<4x8x16xf32> -> vector<4x8x16xf32>
    "tpu.trace_stop"() : () -> ()
    %55 = vector.extract_strided_slice %54 {offsets = [0, 0, 0], sizes = [2, 8, 16], strides = [1, 1, 1]} : vector<4x8x16xf32> to vector<2x8x16xf32>
    %56 = vector.extract_strided_slice %54 {offsets = [2, 0, 0], sizes = [2, 8, 16], strides = [1, 1, 1]} : vector<4x8x16xf32> to vector<2x8x16xf32>
    %57 = tpu.concatenate %55, %56 in 2 : vector<2x8x16xf32>, vector<2x8x16xf32> -> vector<2x8x32xf32>
    %58 = vector.shape_cast %57 : vector<2x8x32xf32> to vector<16x32xf32>
    %c0_25 = arith.constant 0 : index
    %c0_26 = arith.constant 0 : index
    %59 = vector.load %arg5[%c0_25, %c0_26] : memref<32x32xf32, #tpu.memory_space<vmem>>, vector<32x32xf32>
    %cst_27 = arith.constant dense<0.000000e+00> : vector<16x32xf32>
    %60 = tpu.matmul %58, %59, %cst_27 {dimension_numbers = #tpu.dot_dimension_numbers<[1], [0], [0], [1], [0, 0, 1, 1], [], []>} : vector<16x32xf32>, vector<32x32xf32>, vector<16x32xf32> -> vector<16x32xf32>
    %61 = vector.shape_cast %60 : vector<16x32xf32> to vector<2x8x32xf32>
    %62 = vector.extract_strided_slice %61 {offsets = [0, 0, 0], sizes = [2, 1, 32], strides = [1, 1, 1]} : vector<2x8x32xf32> to vector<2x1x32xf32>
    %63 = vector.shape_cast %62 : vector<2x1x32xf32> to vector<2x32xf32>
    %64 = vector.extract_strided_slice %61 {offsets = [0, 1, 0], sizes = [2, 1, 32], strides = [1, 1, 1]} : vector<2x8x32xf32> to vector<2x1x32xf32>
    %65 = vector.shape_cast %64 : vector<2x1x32xf32> to vector<2x32xf32>
    %66 = vector.extract_strided_slice %61 {offsets = [0, 2, 0], sizes = [2, 1, 32], strides = [1, 1, 1]} : vector<2x8x32xf32> to vector<2x1x32xf32>
    %67 = vector.shape_cast %66 : vector<2x1x32xf32> to vector<2x32xf32>
    %68 = vector.extract_strided_slice %61 {offsets = [0, 3, 0], sizes = [2, 1, 32], strides = [1, 1, 1]} : vector<2x8x32xf32> to vector<2x1x32xf32>
    %69 = vector.shape_cast %68 : vector<2x1x32xf32> to vector<2x32xf32>
    %70 = vector.extract_strided_slice %61 {offsets = [0, 4, 0], sizes = [2, 1, 32], strides = [1, 1, 1]} : vector<2x8x32xf32> to vector<2x1x32xf32>
    %71 = vector.shape_cast %70 : vector<2x1x32xf32> to vector<2x32xf32>
    %72 = vector.extract_strided_slice %61 {offsets = [0, 5, 0], sizes = [2, 1, 32], strides = [1, 1, 1]} : vector<2x8x32xf32> to vector<2x1x32xf32>
    %73 = vector.shape_cast %72 : vector<2x1x32xf32> to vector<2x32xf32>
    %74 = vector.extract_strided_slice %61 {offsets = [0, 6, 0], sizes = [2, 1, 32], strides = [1, 1, 1]} : vector<2x8x32xf32> to vector<2x1x32xf32>
    %75 = vector.shape_cast %74 : vector<2x1x32xf32> to vector<2x32xf32>
    %76 = vector.extract_strided_slice %61 {offsets = [0, 7, 0], sizes = [2, 1, 32], strides = [1, 1, 1]} : vector<2x8x32xf32> to vector<2x1x32xf32>
    %77 = vector.shape_cast %76 : vector<2x1x32xf32> to vector<2x32xf32>
    %78 = tpu.concatenate %63, %65, %67, %69, %71, %73, %75, %77 in 1 : vector<2x32xf32>, vector<2x32xf32>, vector<2x32xf32>, vector<2x32xf32>, vector<2x32xf32>, vector<2x32xf32>, vector<2x32xf32>, vector<2x32xf32> -> vector<2x256xf32>
    %c0_28 = arith.constant 0 : index
    %c0_29 = arith.constant 0 : index
    %79 = vector.load %arg6[%c0_28, %c0_29] : memref<2x256xf32, #tpu.memory_space<vmem>>, vector<2x256xf32>
    tpu.vector_store %arg6[%c0_28, %c0_29], %78 {strides = array<i32>} : memref<2x256xf32, #tpu.memory_space<vmem>>, vector<2x256xf32>,
    return
  }
  func.func @transform_0(%arg0: i32) -> (i32, i32, i32) {
    %c0_i32 = arith.constant 0 : i32
    %c0_i32_0 = arith.constant 0 : i32
    %c0_i32_1 = arith.constant 0 : i32
    return %arg0, %c0_i32, %c0_i32_0 : i32, i32, i32
  }
  func.func @transform_1(%arg0: i32) -> (i32, i32, i32) {
    %c0_i32 = arith.constant 0 : i32
    %c0_i32_0 = arith.constant 0 : i32
    %c0_i32_1 = arith.constant 0 : i32
    return %arg0, %c0_i32, %c0_i32_0 : i32, i32, i32
  }
  func.func @transform_2(%arg0: i32) -> (i32, i32, i32) {
    %c0_i32 = arith.constant 0 : i32
    %c0_i32_0 = arith.constant 0 : i32
    %c0_i32_1 = arith.constant 0 : i32
    return %arg0, %c0_i32, %c0_i32_0 : i32, i32, i32
  }
  func.func @transform_3(%arg0: i32) -> (i32, i32, i32) {
    %c0_i32 = arith.constant 0 : i32
    %c0_i32_0 = arith.constant 0 : i32
    %c0_i32_1 = arith.constant 0 : i32
    %c0_i32_2 = arith.constant 0 : i32
    return %c0_i32, %c0_i32_0, %c0_i32_1 : i32, i32, i32
  }
  func.func @transform_4(%arg0: i32) -> (i32, i32) {
    %c0_i32 = arith.constant 0 : i32
    %c0_i32_0 = arith.constant 0 : i32
    %c0_i32_1 = arith.constant 0 : i32
    return %c0_i32, %c0_i32_0 : i32, i32
  }
  func.func @transform_5(%arg0: i32) -> (i32, i32) {
    %c0_i32 = arith.constant 0 : i32
    %c0_i32_0 = arith.constant 0 : i32
    return %arg0, %c0_i32 : i32, i32
  }
}

</mosaic_0001>

<llo_original>
// kernel: tpu_custom_call.1
$region0: #{tpu_custom_call.1}
  #allocation0 [shape = 'u32[]', space=smem, size = 0x4, offset = 0x4, fixed_abs, tag = 'smem constant byte address 0x4 - core index']
  #allocation1 [shape = 'u32[72,128]{1,0:T(1,128)}', space=vmem, size = 0x9000, scoped, tag = 'internal scratch']
  %s0 = inlined_call_operand.hbm [shape: f32[2,8,32], index: 0, kind: input, shape index: {}]
  %s1 = inlined_call_operand.hbm [shape: f32[2,8,32], index: 1, kind: input, shape index: {}]
  %s2 = inlined_call_operand.hbm [shape: f32[2,8,32], index: 2, kind: input, shape index: {}]
  %s3 = inlined_call_operand.hbm [shape: f32[3,32,32], index: 3, kind: input, shape index: {}]
  %s4 = inlined_call_operand.hbm [shape: f32[32,32], index: 4, kind: input, shape index: {}]
  %s5 = inlined_call_operand.hbm [shape: f32[2,256], index: 5, kind: output, shape index: {}]
  %s6 = sld [smem:[#allocation0]]
  $region50: #{tpu_custom_call.1} parent=0
    _
  %s8 = ssub.s32 1, %s6
  %s9 = scalar_select 0, %s8, %s6
  $region1: #{tpu_custom_call.1} parent=0
    #allocation2 [shape = 'u8[8192]{0}', space=vmem, size = 0x2000, scoped, tag = 'input window, operand 0, single buffered']
    #allocation3 [shape = 's32[1]{0}', space=sflag, size = 0x4, scoped, tag = 'scoped memory for tpu_custom_call.1']
    #allocation4 [shape = 's32[1]{0}', space=sflag, size = 0x4, scoped, tag = 'scoped memory for tpu_custom_call.1']
    #allocation5 [shape = 'u8[8192]{0}', space=vmem, size = 0x2000, scoped, tag = 'input window, operand 1, single buffered']
    #allocation6 [shape = 's32[1]{0}', space=sflag, size = 0x4, scoped, tag = 'scoped memory for tpu_custom_call.1']
    #allocation7 [shape = 'u8[8192]{0}', space=vmem, size = 0x2000, scoped, tag = 'input window, operand 2, single buffered']
    #allocation8 [shape = 'u8[49152]{0}', space=vmem, size = 0xc000, scoped, tag = 'input window, operand 3, single buffered']
    #allocation9 [shape = 's32[1]{0}', space=sflag, size = 0x4, scoped, tag = 'scoped memory for tpu_custom_call.1']
    #allocation10 [shape = 'u8[16384]{0}', space=vmem, size = 0x4000, scoped, tag = 'input window, operand 4, single buffered']
    #allocation11 [shape = 'u8[2048]{0}', space=vmem, size = 0x800, scoped, tag = 'output window, operand 0, single buffered']
    %10 = vsyncpa [#allocation3], 0
    %11 = vsyncpa [#allocation6], 0
    %12 = vsyncpa [#allocation9], 0
    %13 = vsyncpa [#allocation4], 0
    // Predicated region
    $region2: #{tpu_custom_call.1} parent=1 // pred_check
      _
    $region3: #{tpu_custom_call.1} parent=1 // pred_check_branch
      %15 = sbr.rel (0) target = $region5
    $region4: #{tpu_custom_call.1} parent=1 // pred_region
      %17 = vsyncadd [#allocation3], 0
      %s18 = sshll.u32 %s0, 4
      %s19 = int_to_ptr.hbm [resolvable:$true] %s18
      %s20 = sshll.u32 [#allocation2], 4
      %s21 = int_to_ptr.vmem [resolvable:$true] %s20
      %26 = dma.hbm_to_vmem [thread:$0]  %s19, 256, %s21, [#allocation3], 128, 128, 8
    $region5: #{tpu_custom_call.1} parent=1 // pred_fallthru
      _
    // Predicated region
    $region6: #{tpu_custom_call.1} parent=1 // pred_check
      _
    $region7: #{tpu_custom_call.1} parent=1 // pred_check_branch
      %28 = sbr.rel (0) target = $region9
    $region8: #{tpu_custom_call.1} parent=1 // pred_region
      %30 = vsyncadd [#allocation6], 0
      %s31 = sshll.u32 %s1, 4
      %s32 = int_to_ptr.hbm [resolvable:$true] %s31
      %s33 = sshll.u32 [#allocation5], 4
      %s34 = int_to_ptr.vmem [resolvable:$true] %s33
      %39 = dma.hbm_to_vmem [thread:$0]  %s32, 256, %s34, [#allocation6], 128, 128, 8
    $region9: #{tpu_custom_call.1} parent=1 // pred_fallthru
      _
    // Predicated region
    $region10: #{tpu_custom_call.1} parent=1 // pred_check
      _
    $region11: #{tpu_custom_call.1} parent=1 // pred_check_branch
      %41 = sbr.rel (0) target = $region13
    $region12: #{tpu_custom_call.1} parent=1 // pred_region
      %43 = vsyncadd [#allocation6], 0
      %s44 = sshll.u32 %s2, 4
      %s45 = int_to_ptr.hbm [resolvable:$true] %s44
      %s46 = sshll.u32 [#allocation7], 4
      %s47 = int_to_ptr.vmem [resolvable:$true] %s46
      %52 = dma.hbm_to_vmem [thread:$0]  %s45, 256, %s47, [#allocation6], 128, 128, 8
    $region13: #{tpu_custom_call.1} parent=1 // pred_fallthru
      _
    // Predicated region
    $region14: #{tpu_custom_call.1} parent=1 // pred_check
      _
    $region15: #{tpu_custom_call.1} parent=1 // pred_check_branch
      %54 = sbr.rel (0) target = $region17
    $region16: #{tpu_custom_call.1} parent=1 // pred_region
      %56 = vsyncadd [#allocation9], 0
      %s57 = sshll.u32 %s3, 4
      %s58 = int_to_ptr.hbm [resolvable:$true] %s57
      %s59 = sshll.u32 [#allocation8], 4
      %s60 = int_to_ptr.vmem [resolvable:$true] %s59
      %65 = dma.hbm_to_vmem [thread:$0]  %s58, 1536, %s60, [#allocation9], 128, 128, 8
    $region17: #{tpu_custom_call.1} parent=1 // pred_fallthru
      _
    // Predicated region
    $region18: #{tpu_custom_call.1} parent=1 // pred_check
      _
    $region19: #{tpu_custom_call.1} parent=1 // pred_check_branch
      %67 = sbr.rel (0) target = $region21
    $region20: #{tpu_custom_call.1} parent=1 // pred_region
      %69 = vsyncadd [#allocation9], 0
      %s70 = sshll.u32 %s4, 4
      %s71 = int_to_ptr.hbm [resolvable:$true] %s70
      %s72 = sshll.u32 [#allocation10], 4
      %s73 = int_to_ptr.vmem [resolvable:$true] %s72
      %78 = dma.hbm_to_vmem [thread:$0]  %s71, 512, %s73, [#allocation9], 128, 128, 8
    $region21: #{tpu_custom_call.1} parent=1 // pred_fallthru
      _
    // Predicated region
    $region22: #{tpu_custom_call.1} parent=1 // pred_check
      _
    $region23: #{tpu_custom_call.1} parent=1 // pred_check_branch
      %80 = sbr.rel (0) target = $region25
    $region24: #{tpu_custom_call.1} parent=1 // pred_region
      %82 = dma.done [#allocation3], 256
    $region25: #{tpu_custom_call.1} parent=1 // pred_fallthru
      _
    // Predicated region
    $region26: #{tpu_custom_call.1} parent=1 // pred_check
      _
    $region27: #{tpu_custom_call.1} parent=1 // pred_check_branch
      %84 = sbr.rel (0) target = $region29
    $region28: #{tpu_custom_call.1} parent=1 // pred_region
      %86 = dma.done [#allocation6], 256
    $region29: #{tpu_custom_call.1} parent=1 // pred_fallthru
      _
    // Predicated region
    $region30: #{tpu_custom_call.1} parent=1 // pred_check
      _
    $region31: #{tpu_custom_call.1} parent=1 // pred_check_branch
      %88 = sbr.rel (0) target = $region33
    $region32: #{tpu_custom_call.1} parent=1 // pred_region
      %90 = dma.done [#allocation6], 256
    $region33: #{tpu_custom_call.1} parent=1 // pred_fallthru
      _
    // Predicated region
    $region34: #{tpu_custom_call.1} parent=1 // pred_check
      _
    $region35: #{tpu_custom_call.1} parent=1 // pred_check_branch
      %92 = sbr.rel (0) target = $region37
    $region36: #{tpu_custom_call.1} parent=1 // pred_region
      %94 = dma.done [#allocation9], 1536
    $region37: #{tpu_custom_call.1} parent=1 // pred_fallthru
      _
    // Predicated region
    $region38: #{tpu_custom_call.1} parent=1 // pred_check
      _
    $region39: #{tpu_custom_call.1} parent=1 // pred_check_branch
      %96 = sbr.rel (0) target = $region41
    $region40: #{tpu_custom_call.1} parent=1 // pred_region
      %98 = dma.done [#allocation9], 512
    $region41: #{tpu_custom_call.1} parent=1 // pred_fallthru
      _
    %v99 = vld [vmem:[#allocation2] sm:$0xff]
    %v100 = vld [vmem:[#allocation2 + $0x8] sm:$0xff]
    %v101 = vld [vmem:[#allocation5] sm:$0xff]
    %v102 = vld [vmem:[#allocation5 + $0x8] sm:$0xff]
    %v103 = vld [vmem:[#allocation7] sm:$0xff]
    %v104 = vld [vmem:[#allocation7 + $0x8] sm:$0xff]
    %v105 = vld [vmem:[#allocation8] sm:$0xff]
    %v106 = vld [vmem:[#allocation8 + $0x8] sm:$0xff]
    %v107 = vld [vmem:[#allocation8 + $0x10] sm:$0xff]
    %v108 = vld [vmem:[#allocation8 + $0x18] sm:$0xff]
    %vm109 = vcmask 261120
    %v111 = vsel %vm109, %v99, 0
    %v114 = vsel %vm109, %v100, 0
    %116 = vmatpush.msra.mxu0 0.0
    %117 = vmatpush.msra.mxu0 0.0
    %118 = vmatpush.msra.mxu0 0.0
    %119 = vmatpush.msra.mxu0 0.0
    %120 = vmatpush.msra.mxu0 0.0
    %121 = vmatpush.msra.mxu0 0.0
    %122 = vmatpush.msra.mxu0 0.0
    %123 = vmatpush.msra.mxu0 0.0
    %124 = vmatpush.msra.mxu0 0.0
    %125 = vmatpush.msra.mxu0 0.0
    %126 = vmatpush.msra.mxu0 0.0
    %127 = vmatpush.msra.mxu0 0.0
    %128 = vmatpush.msra.mxu0 %v108
    %129 = vmatpush.msra.mxu0 %v107
    %130 = vmatpush.msra.mxu0 %v106
    %131 = vmatpush.msra.mxu0 %v105
    %132 = vmatmul.f32.gmra.mxu0 %v111
    %v133 = vpop.f32.mrf.mxu0
    %v134 = vadd.f32 0.0, %v133
    %135 = vmatmul.f32.gmra.mxu0 %v114
    %v136 = vpop.f32.mrf.mxu0
    %v137 = vadd.f32 0.0, %v136
    %138 = vdwg.mxu0
    %s139 = scalar_lea.vmem [#allocation8], 32
    %v140 = vld [vmem:[%s139] sm:$0xff]
    %v141 = vld [vmem:[%s139 + $0x8] sm:$0xff]
    %v142 = vld [vmem:[%s139 + $0x10] sm:$0xff]
    %v143 = vld [vmem:[%s139 + $0x18] sm:$0xff]
    %v145 = vsel %vm109, %v101, 0
    %v148 = vsel %vm109, %v102, 0
    %150 = vmatpush.msra.mxu0 0.0
    %151 = vmatpush.msra.mxu0 0.0
    %152 = vmatpush.msra.mxu0 0.0
    %153 = vmatpush.msra.mxu0 0.0
    %154 = vmatpush.msra.mxu0 0.0
    %155 = vmatpush.msra.mxu0 0.0
    %156 = vmatpush.msra.mxu0 0.0
    %157 = vmatpush.msra.mxu0 0.0
    %158 = vmatpush.msra.mxu0 0.0
    %159 = vmatpush.msra.mxu0 0.0
    %160 = vmatpush.msra.mxu0 0.0
    %161 = vmatpush.msra.mxu0 0.0
    %162 = vmatpush.msra.mxu0 %v143
    %163 = vmatpush.msra.mxu0 %v142
    %164 = vmatpush.msra.mxu0 %v141
    %165 = vmatpush.msra.mxu0 %v140
    %166 = vmatmul.f32.gmra.mxu0 %v145
    %v167 = vpop.f32.mrf.mxu0
    %v168 = vadd.f32 0.0, %v167
    %169 = vmatmul.f32.gmra.mxu0 %v148
    %v170 = vpop.f32.mrf.mxu0
    %v171 = vadd.f32 0.0, %v170
    %172 = vdwg.mxu0
    %s173 = scalar_lea.vmem [#allocation8], 64
    %v174 = vld [vmem:[%s173] sm:$0xff]
    %v175 = vld [vmem:[%s173 + $0x8] sm:$0xff]
    %v176 = vld [vmem:[%s173 + $0x10] sm:$0xff]
    %v177 = vld [vmem:[%s173 + $0x18] sm:$0xff]
    %v179 = vsel %vm109, %v103, 0
    %v182 = vsel %vm109, %v104, 0
    %184 = vmatpush.msra.mxu0 0.0
    %185 = vmatpush.msra.mxu0 0.0
    %186 = vmatpush.msra.mxu0 0.0
    %187 = vmatpush.msra.mxu0 0.0
    %188 = vmatpush.msra.mxu0 0.0
    %189 = vmatpush.msra.mxu0 0.0
    %190 = vmatpush.msra.mxu0 0.0
    %191 = vmatpush.msra.mxu0 0.0
    %192 = vmatpush.msra.mxu0 0.0
    %193 = vmatpush.msra.mxu0 0.0
    %194 = vmatpush.msra.mxu0 0.0
    %195 = vmatpush.msra.mxu0 0.0
    %196 = vmatpush.msra.mxu0 %v177
    %197 = vmatpush.msra.mxu0 %v176
    %198 = vmatpush.msra.mxu0 %v175
    %199 = vmatpush.msra.mxu0 %v174
    %200 = vmatmul.f32.gmra.mxu0 %v179
    %v201 = vpop.f32.mrf.mxu0
    %v202 = vadd.f32 0.0, %v201
    %203 = vmatmul.f32.gmra.mxu0 %v182
    %v204 = vpop.f32.mrf.mxu0
    %v205 = vadd.f32 0.0, %v204
    %206 = vdwg.mxu0
    %209 = vrot.lane.b32.xlu0 %v134, 112
    %v210 = vpop.permute.xlu0 %209
    %211 = vrot.lane.b32.xlu0 %v137, 112
    %v212 = vpop.permute.xlu0 %211
    %215 = vrot.lane.b32.xlu0 %v168, 112
    %v216 = vpop.permute.xlu0 %215
    %217 = vrot.lane.b32.xlu0 %v171, 112
    %v218 = vpop.permute.xlu0 %217
    %221 = vrot.lane.b32.xlu0 %v202, 112
    %v222 = vpop.permute.xlu0 %221
    %223 = vrot.lane.b32.xlu0 %v205, 112
    %v224 = vpop.permute.xlu0 %223
    %v227 = vlaneseq
    %v228 = vshrl.u32 %v227, 7
    %v229 = vlaneseq
    %v230 = vand.u32 %v229, 127
    %vm231 = vcmp.ge.s32.totalorder %v230, %v228
    %vm232 = vcmp.eq.s32.totalorder %v228, 0
    %vm233 = vcmp.eq.s32.totalorder %v230, 0
    %vm234 = vmand %vm232, %vm233
    %vm235 = vmxor %vm234, 1
    %vm236 = vmand %vm231, %vm235
    %v237 = vsel %vm236, -1e+30, 0.0
    %vm238 = vcmask 130048
    %v239 = vsel %vm238, %v134, 0
    %v241 = vsel %vm238, %v168, 0
    %243 = vmatpush.xpose.msra.mxu0 0.0
    %244 = vmatpush.xpose.msra.mxu0 0.0
    %245 = vmatpush.xpose.msra.mxu0 0.0
    %246 = vmatpush.xpose.msra.mxu0 0.0
    %247 = vmatpush.xpose.msra.mxu0 0.0
    %248 = vmatpush.xpose.msra.mxu0 0.0
    %249 = vmatpush.xpose.msra.mxu0 0.0
    %250 = vmatpush.xpose.msra.mxu0 0.0
    %251 = vmatpush.xpose.msra.mxu0 0.0
    %252 = vmatpush.xpose.msra.mxu0 0.0
    %253 = vmatpush.xpose.msra.mxu0 0.0
    %254 = vmatpush.xpose.msra.mxu0 0.0
    %255 = vmatpush.xpose.msra.mxu0 0.0
    %256 = vmatpush.xpose.msra.mxu0 0.0
    %257 = vmatpush.xpose.msra.mxu0 0.0
    %258 = vmatpush.xpose.msra.mxu0 %v241
    %259 = vmatmul.f32.gmra.mxu0 %v239
    %v260 = vpop.f32.mrf.mxu0
    %v261 = vadd.f32 %v237, %v260
    %262 = vdwg.mxu0
    %v263 = vsel %vm238, %v137, 0
    %v265 = vsel %vm238, %v171, 0
    %267 = vmatpush.xpose.msra.mxu0 0.0
    %268 = vmatpush.xpose.msra.mxu0 0.0
    %269 = vmatpush.xpose.msra.mxu0 0.0
    %270 = vmatpush.xpose.msra.mxu0 0.0
    %271 = vmatpush.xpose.msra.mxu0 0.0
    %272 = vmatpush.xpose.msra.mxu0 0.0
    %273 = vmatpush.xpose.msra.mxu0 0.0
    %274 = vmatpush.xpose.msra.mxu0 0.0
    %275 = vmatpush.xpose.msra.mxu0 0.0
    %276 = vmatpush.xpose.msra.mxu0 0.0
    %277 = vmatpush.xpose.msra.mxu0 0.0
    %278 = vmatpush.xpose.msra.mxu0 0.0
    %279 = vmatpush.xpose.msra.mxu0 0.0
    %280 = vmatpush.xpose.msra.mxu0 0.0
    %281 = vmatpush.xpose.msra.mxu0 0.0
    %282 = vmatpush.xpose.msra.mxu0 %v265
    %283 = vmatmul.f32.gmra.mxu0 %v263
    %v284 = vpop.f32.mrf.mxu0
    %v285 = vadd.f32 %v237, %v284
    %286 = vdwg.mxu0
    %v287 = vsel %vm238, %v210, 0
    %v289 = vsel %vm238, %v216, 0
    %291 = vmatpush.xpose.msra.mxu0 0.0
    %292 = vmatpush.xpose.msra.mxu0 0.0
    %293 = vmatpush.xpose.msra.mxu0 0.0
    %294 = vmatpush.xpose.msra.mxu0 0.0
    %295 = vmatpush.xpose.msra.mxu0 0.0
    %296 = vmatpush.xpose.msra.mxu0 0.0
    %297 = vmatpush.xpose.msra.mxu0 0.0
    %298 = vmatpush.xpose.msra.mxu0 0.0
    %299 = vmatpush.xpose.msra.mxu0 0.0
    %300 = vmatpush.xpose.msra.mxu0 0.0
    %301 = vmatpush.xpose.msra.mxu0 0.0
    %302 = vmatpush.xpose.msra.mxu0 0.0
    %303 = vmatpush.xpose.msra.mxu0 0.0
    %304 = vmatpush.xpose.msra.mxu0 0.0
    %305 = vmatpush.xpose.msra.mxu0 0.0
    %306 = vmatpush.xpose.msra.mxu0 %v289
    %307 = vmatmul.f32.gmra.mxu0 %v287
    %v308 = vpop.f32.mrf.mxu0
    %v309 = vadd.f32 %v237, %v308
    %310 = vdwg.mxu0
    %v311 = vsel %vm238, %v212, 0
    %v313 = vsel %vm238, %v218, 0
    %315 = vmatpush.xpose.msra.mxu0 0.0
    %316 = vmatpush.xpose.msra.mxu0 0.0
    %317 = vmatpush.xpose.msra.mxu0 0.0
    %318 = vmatpush.xpose.msra.mxu0 0.0
    %319 = vmatpush.xpose.msra.mxu0 0.0
    %320 = vmatpush.xpose.msra.mxu0 0.0
    %321 = vmatpush.xpose.msra.mxu0 0.0
    %322 = vmatpush.xpose.msra.mxu0 0.0
    %323 = vmatpush.xpose.msra.mxu0 0.0
    %324 = vmatpush.xpose.msra.mxu0 0.0
    %325 = vmatpush.xpose.msra.mxu0 0.0
    %326 = vmatpush.xpose.msra.mxu0 0.0
    %327 = vmatpush.xpose.msra.mxu0 0.0
    %328 = vmatpush.xpose.msra.mxu0 0.0
    %329 = vmatpush.xpose.msra.mxu0 0.0
    %330 = vmatpush.xpose.msra.mxu0 %v313
    %331 = vmatmul.f32.gmra.mxu0 %v311
    %v332 = vpop.f32.mrf.mxu0
    %v333 = vadd.f32 %v237, %v332
    %334 = vdwg.mxu0
    %vm335 = vcmask 64512
    %v336 = vsel %vm335, %v261, -inf
    %337 = vmax.xlane.f32.xlu0 %v336
    %v338 = vpop.xlane.xlu0 %337
    %v339 = vsel %vm335, %v285, -inf
    %340 = vmax.xlane.f32.xlu0 %v339
    %v341 = vpop.xlane.xlu0 %340
    %v342 = vsel %vm335, %v309, -inf
    %343 = vmax.xlane.f32.xlu0 %v342
    %v344 = vpop.xlane.xlu0 %343
    %v345 = vsel %vm335, %v333, -inf
    %346 = vmax.xlane.f32.xlu0 %v345
    %v347 = vpop.xlane.xlu0 %346
    %v348 = vsub.f32 %v261, %v338
    %v349 = vsub.f32 %v285, %v341
    %v350 = vsub.f32 %v309, %v344
    %v351 = vsub.f32 %v333, %v347
    %v352 = vmul.f32 %v348, 1.442695
    %v353 = vpow.pop %v352
    %v354 = vmul.f32 %v349, 1.442695
    %v355 = vpow.pop %v354
    %v356 = vmul.f32 %v350, 1.442695
    %v357 = vpow.pop %v356
    %v358 = vmul.f32 %v351, 1.442695
    %v359 = vpow.pop %v358
    %v360 = vsel %vm335, %v353, 0.0
    %361 = vadd.xlane.f32.xlu0 %v360
    %v362 = vpop.xlane.xlu0 %361
    %v363 = vsel %vm335, %v355, 0.0
    %364 = vadd.xlane.f32.xlu0 %v363
    %v365 = vpop.xlane.xlu0 %364
    %v366 = vsel %vm335, %v357, 0.0
    %367 = vadd.xlane.f32.xlu0 %v366
    %v368 = vpop.xlane.xlu0 %367
    %v369 = vsel %vm335, %v359, 0.0
    %370 = vadd.xlane.f32.xlu0 %v369
    %v371 = vpop.xlane.xlu0 %370
    %v372 = vrcp.pop %v362
    %v373 = vrcp.pop %v365
    %v374 = vrcp.pop %v368
    %v375 = vrcp.pop %v371
    %v376 = vmul.f32 %v353, %v372
    %v377 = vmul.f32 %v355, %v373
    %v378 = vmul.f32 %v357, %v374
    %v379 = vmul.f32 %v359, %v375
    %v381 = vsel %vm335, %v376, 0
    %383 = vmatpush.msra.mxu0 0.0
    %384 = vmatpush.msra.mxu0 0.0
    %385 = vmatpush.msra.mxu0 0.0
    %386 = vmatpush.msra.mxu0 0.0
    %387 = vmatpush.msra.mxu0 0.0
    %388 = vmatpush.msra.mxu0 0.0
    %389 = vmatpush.msra.mxu0 0.0
    %390 = vmatpush.msra.mxu0 0.0
    %391 = vmatpush.msra.mxu0 0.0
    %392 = vmatpush.msra.mxu0 0.0
    %393 = vmatpush.msra.mxu0 0.0
    %394 = vmatpush.msra.mxu0 0.0
    %395 = vmatpush.msra.mxu0 0.0
    %396 = vmatpush.msra.mxu0 0.0
    %397 = vmatpush.msra.mxu0 0.0
    %398 = vmatpush.msra.mxu0 %v202
    %399 = vmatmul.f32.gmra.mxu0 %v381
    %v400 = vpop.f32.mrf.mxu0
    %v401 = vadd.f32 0.0, %v400
    %402 = vdwg.mxu0
    %v404 = vsel %vm335, %v377, 0
    %406 = vmatpush.msra.mxu0 0.0
    %407 = vmatpush.msra.mxu0 0.0
    %408 = vmatpush.msra.mxu0 0.0
    %409 = vmatpush.msra.mxu0 0.0
    %410 = vmatpush.msra.mxu0 0.0
    %411 = vmatpush.msra.mxu0 0.0
    %412 = vmatpush.msra.mxu0 0.0
    %413 = vmatpush.msra.mxu0 0.0
    %414 = vmatpush.msra.mxu0 0.0
    %415 = vmatpush.msra.mxu0 0.0
    %416 = vmatpush.msra.mxu0 0.0
    %417 = vmatpush.msra.mxu0 0.0
    %418 = vmatpush.msra.mxu0 0.0
    %419 = vmatpush.msra.mxu0 0.0
    %420 = vmatpush.msra.mxu0 0.0
    %421 = vmatpush.msra.mxu0 %v205
    %422 = vmatmul.f32.gmra.mxu0 %v404
    %v423 = vpop.f32.mrf.mxu0
    %v424 = vadd.f32 0.0, %v423
    %425 = vdwg.mxu0
    %v427 = vsel %vm335, %v378, 0
    %429 = vmatpush.msra.mxu0 0.0
    %430 = vmatpush.msra.mxu0 0.0
    %431 = vmatpush.msra.mxu0 0.0
    %432 = vmatpush.msra.mxu0 0.0
    %433 = vmatpush.msra.mxu0 0.0
    %434 = vmatpush.msra.mxu0 0.0
    %435 = vmatpush.msra.mxu0 0.0
    %436 = vmatpush.msra.mxu0 0.0
    %437 = vmatpush.msra.mxu0 0.0
    %438 = vmatpush.msra.mxu0 0.0
    %439 = vmatpush.msra.mxu0 0.0
    %440 = vmatpush.msra.mxu0 0.0
    %441 = vmatpush.msra.mxu0 0.0
    %442 = vmatpush.msra.mxu0 0.0
    %443 = vmatpush.msra.mxu0 0.0
    %444 = vmatpush.msra.mxu0 %v222
    %445 = vmatmul.f32.gmra.mxu0 %v427
    %v446 = vpop.f32.mrf.mxu0
    %v447 = vadd.f32 0.0, %v446
    %448 = vdwg.mxu0
    %v450 = vsel %vm335, %v379, 0
    %452 = vmatpush.msra.mxu0 0.0
    %453 = vmatpush.msra.mxu0 0.0
    %454 = vmatpush.msra.mxu0 0.0
    %455 = vmatpush.msra.mxu0 0.0
    %456 = vmatpush.msra.mxu0 0.0
    %457 = vmatpush.msra.mxu0 0.0
    %458 = vmatpush.msra.mxu0 0.0
    %459 = vmatpush.msra.mxu0 0.0
    %460 = vmatpush.msra.mxu0 0.0
    %461 = vmatpush.msra.mxu0 0.0
    %462 = vmatpush.msra.mxu0 0.0
    %463 = vmatpush.msra.mxu0 0.0
    %464 = vmatpush.msra.mxu0 0.0
    %465 = vmatpush.msra.mxu0 0.0
    %466 = vmatpush.msra.mxu0 0.0
    %467 = vmatpush.msra.mxu0 %v224
    %468 = vmatmul.f32.gmra.mxu0 %v450
    %v469 = vpop.f32.mrf.mxu0
    %v470 = vadd.f32 0.0, %v469
    %471 = vdwg.mxu0
    %474 = vrot.lane.b32.xlu0 %v447, 16
    %v475 = vpop.permute.xlu0 %474
    %476 = vrot.lane.b32.xlu0 %v470, 16
    %v477 = vpop.permute.xlu0 %476
    %v480 = vsel %vm238, %v401, %v475
    %v481 = vsel %vm238, %v424, %v477
    %v482 = vld [vmem:[#allocation10] sm:$0xff]
    %v483 = vld [vmem:[#allocation10 + $0x8] sm:$0xff]
    %v484 = vld [vmem:[#allocation10 + $0x10] sm:$0xff]
    %v485 = vld [vmem:[#allocation10 + $0x18] sm:$0xff]
    %v487 = vsel %vm109, %v480, 0
    %v490 = vsel %vm109, %v481, 0
    %492 = vmatpush.msra.mxu0 0.0
    %493 = vmatpush.msra.mxu0 0.0
    %494 = vmatpush.msra.mxu0 0.0
    %495 = vmatpush.msra.mxu0 0.0
    %496 = vmatpush.msra.mxu0 0.0
    %497 = vmatpush.msra.mxu0 0.0
    %498 = vmatpush.msra.mxu0 0.0
    %499 = vmatpush.msra.mxu0 0.0
    %500 = vmatpush.msra.mxu0 0.0
    %501 = vmatpush.msra.mxu0 0.0
    %502 = vmatpush.msra.mxu0 0.0
    %503 = vmatpush.msra.mxu0 0.0
    %504 = vmatpush.msra.mxu0 %v485
    %505 = vmatpush.msra.mxu0 %v484
    %506 = vmatpush.msra.mxu0 %v483
    %507 = vmatpush.msra.mxu0 %v482
    %508 = vmatmul.f32.gmra.mxu0 %v487
    %v509 = vpop.f32.mrf.mxu0
    %v510 = vadd.f32 0.0, %v509
    %511 = vmatmul.f32.gmra.mxu0 %v490
    %v512 = vpop.f32.mrf.mxu0
    %v513 = vadd.f32 0.0, %v512
    %514 = vdwg.mxu0
    %v517 = vrot.slane %v513, 7
    %vm518 = vcmask 1041409
    %v519 = vsel %vm518, %v517, %v510
    %v521 = vrot.slane %v510, 1
    %v522 = vsel %vm518, %v513, %v521
    %523 = vrot.lane.b32.xlu0 %v522, 32
    %v524 = vpop.permute.xlu0 %523
    %v526 = vrot.slane %v510, 2
    %v527 = vrot.slane %v513, 1
    %v528 = vsel %vm518, %v527, %v526
    %529 = vrot.lane.b32.xlu0 %v528, 64
    %v530 = vpop.permute.xlu0 %529
    %v532 = vrot.slane %v510, 3
    %v533 = vrot.slane %v513, 2
    %v534 = vsel %vm518, %v533, %v532
    %535 = vrot.lane.b32.xlu0 %v534, 96
    %v536 = vpop.permute.xlu0 %535
    %v538 = vrot.slane %v510, 4
    %v539 = vrot.slane %v513, 3
    %v540 = vsel %vm518, %v539, %v538
    %v542 = vrot.slane %v510, 5
    %v543 = vrot.slane %v513, 4
    %v544 = vsel %vm518, %v543, %v542
    %545 = vrot.lane.b32.xlu0 %v544, 32
    %v546 = vpop.permute.xlu0 %545
    %v548 = vrot.slane %v510, 6
    %v549 = vrot.slane %v513, 5
    %v550 = vsel %vm518, %v549, %v548
    %551 = vrot.lane.b32.xlu0 %v550, 64
    %v552 = vpop.permute.xlu0 %551
    %v554 = vrot.slane %v510, 7
    %v555 = vrot.slane %v513, 6
    %v556 = vsel %vm518, %v555, %v554
    %557 = vrot.lane.b32.xlu0 %v556, 96
    %v558 = vpop.permute.xlu0 %557
    %v560 = vsel %vm109, %v519, %v524
    %vm561 = vcmask 523264
    %v562 = vsel %vm561, %v560, %v530
    %vm563 = vcmask 785408
    %v564 = vsel %vm563, %v562, %v536
    %v565 = vsel %vm109, %v540, %v546
    %v566 = vsel %vm561, %v565, %v552
    %v567 = vsel %vm563, %v566, %v558
    %v570 = vrot.slane %v567, 6
    %vm571 = vcmask 1041408
    %v572 = vsel %vm571, %v564, %v570
    %574 = vst [vmem:[#allocation11] sm:$0xf] %v572
    // Predicated region
    $region42: #{tpu_custom_call.1} parent=1 // pred_check
      _
    $region43: #{tpu_custom_call.1} parent=1 // pred_check_branch
      %576 = sbr.rel (0) target = $region45
    $region44: #{tpu_custom_call.1} parent=1 // pred_region
      %578 = vsyncadd [#allocation4], 0
      %s580 = sshll.u32 [#allocation11], 4
      %s581 = int_to_ptr.vmem [resolvable:$true] %s580
      %s582 = sshll.u32 %s5, 4
      %s583 = int_to_ptr.hbm [resolvable:$true] %s582
      %585 = dma.vmem_to_hbm [thread:$0]  %s581, 64, %s583, [#allocation4]
    $region45: #{tpu_custom_call.1} parent=1 // pred_fallthru
      _
    // Predicated region
    $region46: #{tpu_custom_call.1} parent=1 // pred_check
      _
    $region47: #{tpu_custom_call.1} parent=1 // pred_check_branch
      %587 = sbr.rel (0) target = $region49
    $region48: #{tpu_custom_call.1} parent=1 // pred_region
      %589 = dma.done [#allocation4], 64
    $region49: #{tpu_custom_call.1} parent=1 // pred_fallthru
      _
    %590 = vsyncpa [#allocation3], 1
    %591 = vsyncpa [#allocation6], 1
    %592 = vsyncpa [#allocation9], 1
    %593 = vsyncpa [#allocation4], 1

</llo_original>
